<compile_context>
chip_gen: v7x
topology: tpu7x:2x2x1
jax: 0.10.0
libtpu: 0.0.40
codegen_flags: <defaults>
</compile_context>

<pallas_src>
import functools

import jax
import jax.numpy as jnp
from jax import lax
from jax.experimental import pallas as pl
from jax.experimental.pallas import tpu as pltpu

_NEG_BIG = -1.0e30  # stands in for -inf on the diagonal / padded columns


def _round_up(x, m):
    return ((x + m - 1) // m) * m


def _ntxent_kernel(q_ref, k_ref, o_ref, m_ref, l_ref, pos_ref, *,
                   inv_t, batch_size, n_valid, block_q, block_k):
    # q_ref: (block_q, Dpad), k_ref: (block_k, Dpad) feature tiles (bf16 or f32)
    # o_ref: (block_q, 1) per-row loss (written on the last column tile)
    # m/l/pos_ref: (block_q, 1) f32 online-softmax state (persist across kj)
    qi = pl.program_id(0)
    kj = pl.program_id(1)
    nk = pl.num_programs(1)

    @pl.when(kj == 0)
    def _init():
        m_ref[...] = jnp.full_like(m_ref, _NEG_BIG)
        l_ref[...] = jnp.zeros_like(l_ref)
        pos_ref[...] = jnp.zeros_like(pos_ref)

    # Temperature scale folded into the (block_q, D) operand (far cheaper than an
    # n^2 pass over sim).  Python-float scalar keeps the operand dtype (bf16 stays
    # bf16 -> native MXU path); dot_general contracts dim 1 of both operands so no
    # transpose of the key tile is materialized.
    q = q_ref[...] * inv_t
    s = lax.dot_general(q, k_ref[...],
                        dimension_numbers=(((1,), (1,)), ((), ())),
                        preferred_element_type=jnp.float32)  # (block_q, block_k) f32

    # torch.nan_to_num(sim, nan=0, posinf=1e5, neginf=-1e5)
    s = jnp.nan_to_num(s, nan=0.0, posinf=1.0e5, neginf=-1.0e5)

    # One small iota per axis; masks are built by broadcasting (no (n,n) int temps).
    row = qi * block_q + lax.broadcasted_iota(jnp.int32, (block_q, 1), 0)
    col = kj * block_k + lax.broadcasted_iota(jnp.int32, (1, block_k), 1)

    # Diagonal -> "-inf" and padded key columns excluded from the softmax.
    kill = (row == col) | (col >= n_valid)
    s = jnp.where(kill, _NEG_BIG, s)

    # labels = cat([arange(B)+B, arange(B)])  <=>  target column = (r + B) mod 2B.
    # The target is never on the diagonal and never a padded column.
    tgt = (row + batch_size) % n_valid
    pos_ref[...] += jnp.sum(jnp.where(col == tgt, s, 0.0), axis=1, keepdims=True)

    # Online logsumexp update.
    m_prev = m_ref[...]
    m_new = jnp.maximum(m_prev, jnp.max(s, axis=1, keepdims=True))
    l_ref[...] = (jnp.exp(m_prev - m_new) * l_ref[...]
                  + jnp.sum(jnp.exp(s - m_new), axis=1, keepdims=True))
    m_ref[...] = m_new

    @pl.when(kj == nk - 1)
    def _finalize():
        lse = m_ref[...] + jnp.log(l_ref[...])
        loss = lse - pos_ref[...]
        # Padded query rows contribute zero.
        o_ref[...] = jnp.where(row < n_valid, loss, 0.0)


def ntxent_loss(z_i, z_j, temperature=0.5, eps=1e-8, *,
                block_size=256, compute_dtype=jnp.bfloat16):
    """NT-Xent loss matching the PyTorch NTXentLoss.forward semantics."""
    b, d = z_i.shape
    n = 2 * b
    inv_t = 1.0 / (temperature + eps)

    # nan guard on the embeddings (unconditional application is equivalent to the
    # torch conditional path).
    # TODO(synk): pass z_i / z_j as separate kernel inputs to skip this concat's
    # extra HBM round trip of the embeddings.
    feats = jnp.concatenate(
        [jnp.nan_to_num(z_i.astype(jnp.float32)),
         jnp.nan_to_num(z_j.astype(jnp.float32))], axis=0)

    # Tile sizes: rows/cols padded to a multiple of the tile, D padded to 128 lanes.
    t = min(block_size, _round_up(n, 8))
    npad = _round_up(n, t)
    dpad = _round_up(d, 128)
    feats = jnp.pad(feats, ((0, npad - n), (0, dpad - d))).astype(compute_dtype)

    nq = npad // t
    nk = npad // t

    kernel = functools.partial(
        _ntxent_kernel, inv_t=inv_t, batch_size=b, n_valid=n,
        block_q=t, block_k=t)

    per_row = pl.pallas_call(
        kernel,
        out_shape=jax.ShapeDtypeStruct((npad, 1), jnp.float32),
        grid=(nq, nk),
        in_specs=[
            pl.BlockSpec((t, dpad), lambda qi, kj: (qi, 0)),  # query rows
            pl.BlockSpec((t, dpad), lambda qi, kj: (kj, 0)),  # key rows
        ],
        out_specs=pl.BlockSpec((t, 1), lambda qi, kj: (qi, 0)),
        scratch_shapes=[
            pltpu.VMEM((t, 1), jnp.float32),   # running max
            pltpu.VMEM((t, 1), jnp.float32),   # running sum-exp
            pltpu.VMEM((t, 1), jnp.float32),   # positive logit
        ],
        compiler_params=pltpu.CompilerParams(
            dimension_semantics=("parallel", "arbitrary")),
    )(feats, feats)

    return jnp.sum(per_row) / max(n, 1)


def _reference_loss(z_i, z_j, temperature=0.5, eps=1e-8):
    # Pure-JAX (f32) reference mirroring the PyTorch forward.
    b = z_i.shape[0]
    feats = jnp.concatenate([jnp.nan_to_num(z_i), jnp.nan_to_num(z_j)], axis=0)
    sim = feats @ feats.T / (temperature + eps)
    sim = jnp.nan_to_num(sim, nan=0.0, posinf=1e5, neginf=-1e5)
    n = 2 * b
    sim = jnp.where(jnp.eye(n, dtype=bool), -jnp.inf, sim)
    labels = jnp.concatenate([jnp.arange(b) + b, jnp.arange(b)])
    lse = jax.nn.logsumexp(sim, axis=1)
    pos = sim[jnp.arange(n), labels]
    return jnp.sum(lse - pos) / max(2 * b, 1)


if __name__ == "__main__":
    key = jax.random.PRNGKey(0)
    k1, k2, k3, k4 = jax.random.split(key, 4)

    # Small shape implied by the module: batch=8, hidden=32.
    B, D = 8, 32
    z_i = jax.random.normal(k1, (B, D), dtype=jnp.float32)
    z_j = jax.random.normal(k2, (B, D), dtype=jnp.float32)
    ref = _reference_loss(z_i, z_j)

    # f32 MXU path — tight tolerance.
    loss_f32 = jax.block_until_ready(ntxent_loss(z_i, z_j, compute_dtype=jnp.float32))
    assert jnp.allclose(loss_f32, ref, rtol=1e-4, atol=1e-3), (loss_f32, ref)

    # Default bf16 MXU path (f32 accumulation) — relaxed tolerance.
    loss_bf16 = jax.block_until_ready(ntxent_loss(z_i, z_j))
    assert jnp.allclose(loss_bf16, ref, rtol=2e-2, atol=5e-2), (loss_bf16, ref)

    # Multi-tile grid (3x3 tiles of 64) with row/column and D padding exercised.
    B2, D2 = 70, 40
    z_i2 = jax.random.normal(k3, (B2, D2), dtype=jnp.float32)
    z_j2 = jax.random.normal(k4, (B2, D2), dtype=jnp.float32)
    ref2 = _reference_loss(z_i2, z_j2)
    loss2_f32 = jax.block_until_ready(
        ntxent_loss(z_i2, z_j2, block_size=64, compute_dtype=jnp.float32))
    assert jnp.allclose(loss2_f32, ref2, rtol=1e-4, atol=1e-3), (loss2_f32, ref2)
    loss2_bf16 = jax.block_until_ready(ntxent_loss(z_i2, z_j2, block_size=64))
    assert jnp.allclose(loss2_bf16, ref2, rtol=2e-2, atol=5e-2), (loss2_bf16, ref2)

    print("KERNEL_OK")
</pallas_src>

<mosaic_0001>
module attributes {stable_mosaic.version = 11 : i64} {
  func.func @_ntxent_kernel(%arg0: i32, %arg1: i32, %arg2: memref<16x128xf32, #tpu.memory_space<vmem>>, %arg3: memref<16x128xf32, #tpu.memory_space<vmem>>, %arg4: memref<16x1xf32, #tpu.memory_space<vmem>>, %arg5: memref<16x1xf32, #tpu.memory_space<vmem>>, %arg6: memref<16x1xf32, #tpu.memory_space<vmem>>, %arg7: memref<16x1xf32, #tpu.memory_space<vmem>>) attributes {dimension_semantics = [#tpu.dimension_semantics<parallel>, #tpu.dimension_semantics<arbitrary>], iteration_bounds = array<i64: 1, 1>, scalar_prefetch = 0 : i64, scratch_operands = 3 : i64, tpu.core_type = #tpu.core_type<tc>, window_params = [{transform_indices = @transform_0, window_bounds = array<i64: 16, 128>}, {transform_indices = @transform_1, window_bounds = array<i64: 16, 128>}, {transform_indices = @transform_2, window_bounds = array<i64: 16, 1>}]} {
    %c0_i32 = arith.constant 0 : i32
    %0 = arith.cmpi eq, %arg1, %c0_i32 : i32
    %1 = arith.extui %0 : i1 to i32
    %c0_i32_0 = arith.constant 0 : i32
    %2 = arith.cmpi ne, %1, %c0_i32_0 : i32
    scf.if %2 {
      %cst_36 = arith.constant -1.000000e+30 : f32
      %83 = vector.broadcast %cst_36 : f32 to vector<16x1xf32>
      %c0_37 = arith.constant 0 : index
      %c0_38 = arith.constant 0 : index
      %84 = vector.load %arg5[%c0_37, %c0_38] : memref<16x1xf32, #tpu.memory_space<vmem>>, vector<16x1xf32>
      tpu.vector_store %arg5[%c0_37, %c0_38], %83 {strides = array<i32>} : memref<16x1xf32, #tpu.memory_space<vmem>>, vector<16x1xf32>,
      %cst_39 = arith.constant 0.000000e+00 : f32
      %85 = vector.broadcast %cst_39 : f32 to vector<16x1xf32>
      %c0_40 = arith.constant 0 : index
      %c0_41 = arith.constant 0 : index
      %86 = vector.load %arg6[%c0_40, %c0_41] : memref<16x1xf32, #tpu.memory_space<vmem>>, vector<16x1xf32>
      tpu.vector_store %arg6[%c0_40, %c0_41], %85 {strides = array<i32>} : memref<16x1xf32, #tpu.memory_space<vmem>>, vector<16x1xf32>,
      %cst_42 = arith.constant 0.000000e+00 : f32
      %87 = vector.broadcast %cst_42 : f32 to vector<16x1xf32>
      %c0_43 = arith.constant 0 : index
      %c0_44 = arith.constant 0 : index
      %88 = vector.load %arg7[%c0_43, %c0_44] : memref<16x1xf32, #tpu.memory_space<vmem>>, vector<16x1xf32>
      tpu.vector_store %arg7[%c0_43, %c0_44], %87 {strides = array<i32>} : memref<16x1xf32, #tpu.memory_space<vmem>>, vector<16x1xf32>,
    } else {
    }
    %c0 = arith.constant 0 : index
    %c0_1 = arith.constant 0 : index
    %3 = vector.load %arg2[%c0, %c0_1] : memref<16x128xf32, #tpu.memory_space<vmem>>, vector<16x128xf32>
    %cst = arith.constant 2.000000e+00 : f32
    %4 = vector.broadcast %cst : f32 to vector<16x128xf32>
    %5 = arith.mulf %3, %4 : vector<16x128xf32>
    %c0_2 = arith.constant 0 : index
    %c0_3 = arith.constant 0 : index
    %6 = vector.load %arg3[%c0_2, %c0_3] : memref<16x128xf32, #tpu.memory_space<vmem>>, vector<16x128xf32>
    %cst_4 = arith.constant dense<0.000000e+00> : vector<16x16xf32>
    %7 = tpu.matmul %5, %6, %cst_4 {dimension_numbers = #tpu.dot_dimension_numbers<[1], [1], [0], [0], [0, 0, 1, 0], [], []>} : vector<16x128xf32>, vector<16x128xf32>, vector<16x16xf32> -> vector<16x16xf32>
    %cst_5 = arith.constant 0.000000e+00 : f32
    %cst_6 = arith.constant -1.000000e+05 : f32
    %cst_7 = arith.constant 1.000000e+05 : f32
    %8 = arith.cmpf one, %7, %7 : vector<16x16xf32>
    %9 = vector.broadcast %cst_5 : f32 to vector<16x16xf32>
    %10 = arith.select %8, %9, %7 : vector<16x16xi1>, vector<16x16xf32>
    %cst_8 = arith.constant 0x7F800000 : f32
    %11 = vector.broadcast %cst_8 : f32 to vector<16x16xf32>
    %12 = arith.cmpf oeq, %10, %11 : vector<16x16xf32>
    %13 = vector.broadcast %cst_7 : f32 to vector<16x16xf32>
    %14 = arith.select %12, %13, %10 : vector<16x16xi1>, vector<16x16xf32>
    %cst_9 = arith.constant 0xFF800000 : f32
    %15 = vector.broadcast %cst_9 : f32 to vector<16x16xf32>
    %16 = arith.cmpf oeq, %14, %15 : vector<16x16xf32>
    %17 = vector.broadcast %cst_6 : f32 to vector<16x16xf32>
    %18 = arith.select %16, %17, %14 : vector<16x16xi1>, vector<16x16xf32>
    %c16_i32 = arith.constant 16 : i32
    %19 = arith.muli %arg0, %c16_i32 : i32
    %20 = tpu.iota {dimensions = array<i32: 0>} : vector<16x1xi32>
    %21 = vector.broadcast %19 : i32 to vector<16x1xi32>
    %22 = arith.addi %21, %20 : vector<16x1xi32>
    %c16_i32_10 = arith.constant 16 : i32
    %23 = arith.muli %arg1, %c16_i32_10 : i32
    %24 = tpu.iota {dimensions = array<i32: 1>} : vector<1x16xi32>
    %25 = vector.broadcast %23 : i32 to vector<1x16xi32>
    %26 = arith.addi %25, %24 : vector<1x16xi32>
    %27 = vector.broadcast %22 : vector<16x1xi32> to vector<16x16xi32>
    %28 = vector.broadcast %26 : vector<1x16xi32> to vector<16x16xi32>
    %29 = arith.cmpi eq, %27, %28 : vector<16x16xi32>
    %c16_i32_11 = arith.constant 16 : i32
    %30 = vector.broadcast %c16_i32_11 : i32 to vector<1x16xi32>
    %31 = arith.cmpi sge, %26, %30 : vector<1x16xi32>
    %32 = vector.broadcast %31 : vector<1x16xi1> to vector<16x16xi1>
    %33 = arith.ori %29, %32 : vector<16x16xi1>
    %cst_12 = arith.constant -1.000000e+30 : f32
    %34 = vector.broadcast %cst_12 : f32 to vector<16x16xf32>
    %35 = arith.select %33, %34, %18 : vector<16x16xi1>, vector<16x16xf32>
    %c8_i32 = arith.constant 8 : i32
    %36 = vector.broadcast %c8_i32 : i32 to vector<16x1xi32>
    %37 = arith.addi %22, %36 : vector<16x1xi32>
    %c16_i32_13 = arith.constant 16 : i32
    %c0_i32_14 = arith.constant 0 : i32
    %38 = arith.cmpi eq, %c16_i32_13, %c0_i32_14 : i32
    %c1_i32 = arith.constant 1 : i32
    %39 = arith.select %38, %c1_i32, %c16_i32_13 : i32
    %40 = vector.broadcast %39 : i32 to vector<16x1xi32>
    %41 = arith.remsi %37, %40 : vector<16x1xi32>
    %c0_i32_15 = arith.constant 0 : i32
    %42 = vector.broadcast %c0_i32_15 : i32 to vector<16x1xi32>
    %43 = arith.cmpi ne, %41, %42 : vector<16x1xi32>
    %c0_i32_16 = arith.constant 0 : i32
    %44 = vector.broadcast %c0_i32_16 : i32 to vector<16x1xi32>
    %45 = arith.cmpi slt, %41, %44 : vector<16x1xi32>
    %c0_i32_17 = arith.constant 0 : i32
    %46 = arith.cmpi slt, %39, %c0_i32_17 : i32
    %47 = vector.broadcast %46 : i1 to vector<16x1xi1>
    %48 = vector.broadcast %47 : vector<16x1xi1> to vector<16x1xi1>
    %49 = arith.xori %45, %48 : vector<16x1xi1>
    %50 = arith.andi %49, %43 : vector<16x1xi1>
    %51 = vector.broadcast %39 : i32 to vector<16x1xi32>
    %52 = arith.addi %41, %51 : vector<16x1xi32>
    %53 = arith.select %50, %52, %41 : vector<16x1xi1>, vector<16x1xi32>
    %c0_18 = arith.constant 0 : index
    %c0_19 = arith.constant 0 : index
    %54 = vector.load %arg7[%c0_18, %c0_19] : memref<16x1xf32, #tpu.memory_space<vmem>>, vector<16x1xf32>
    %55 = vector.broadcast %26 : vector<1x16xi32> to vector<16x16xi32>
    %56 = vector.broadcast %53 : vector<16x1xi32> to vector<16x16xi32>
    %57 = arith.cmpi eq, %55, %56 : vector<16x16xi32>
    %cst_20 = arith.constant 0.000000e+00 : f32
    %58 = vector.broadcast %cst_20 : f32 to vector<16x16xf32>
    %59 = arith.select %57, %35, %58 : vector<16x16xi1>, vector<16x16xf32>
    %cst_21 = arith.constant dense<0.000000e+00> : vector<16xf32>
    %60 = vector.multi_reduction <add>, %59, %cst_21 [1] : vector<16x16xf32> to vector<16xf32>
    %61 = vector.shape_cast %60 : vector<16xf32> to vector<16x1xf32>
    %62 = arith.addf %54, %61 : vector<16x1xf32>
    %c0_22 = arith.constant 0 : index
    %c0_23 = arith.constant 0 : index
    %63 = vector.load %arg7[%c0_22, %c0_23] : memref<16x1xf32, #tpu.memory_space<vmem>>, vector<16x1xf32>
    tpu.vector_store %arg7[%c0_22, %c0_23], %62 {strides = array<i32>} : memref<16x1xf32, #tpu.memory_space<vmem>>, vector<16x1xf32>,
    %c0_24 = arith.constant 0 : index
    %c0_25 = arith.constant 0 : index
    %64 = vector.load %arg5[%c0_24, %c0_25] : memref<16x1xf32, #tpu.memory_space<vmem>>, vector<16x1xf32>
    %cst_26 = arith.constant dense<0xFF800000> : vector<16xf32>
    %65 = vector.multi_reduction <maximumf>, %35, %cst_26 [1] : vector<16x16xf32> to vector<16xf32>
    %66 = vector.shape_cast %65 : vector<16xf32> to vector<16x1xf32>
    %67 = arith.maximumf %64, %66 : vector<16x1xf32>
    %68 = arith.subf %64, %67 : vector<16x1xf32>
    %69 = math.exp %68 : vector<16x1xf32>
    %c0_27 = arith.constant 0 : index
    %c0_28 = arith.constant 0 : index
    %70 = vector.load %arg6[%c0_27, %c0_28] : memref<16x1xf32, #tpu.memory_space<vmem>>, vector<16x1xf32>
    %71 = arith.mulf %69, %70 : vector<16x1xf32>
    %72 = vector.broadcast %67 : vector<16x1xf32> to vector<16x16xf32>
    %73 = arith.subf %35, %72 : vector<16x16xf32>
    %74 = math.exp %73 : vector<16x16xf32>
    %cst_29 = arith.constant dense<0.000000e+00> : vector<16xf32>
    %75 = vector.multi_reduction <add>, %74, %cst_29 [1] : vector<16x16xf32> to vector<16xf32>
    %76 = vector.shape_cast %75 : vector<16xf32> to vector<16x1xf32>
    %77 = arith.addf %71, %76 : vector<16x1xf32>
    %c0_30 = arith.constant 0 : index
    %c0_31 = arith.constant 0 : index
    %78 = vector.load %arg6[%c0_30, %c0_31] : memref<16x1xf32, #tpu.memory_space<vmem>>, vector<16x1xf32>
    tpu.vector_store %arg6[%c0_30, %c0_31], %77 {strides = array<i32>} : memref<16x1xf32, #tpu.memory_space<vmem>>, vector<16x1xf32>,
    %c0_32 = arith.constant 0 : index
    %c0_33 = arith.constant 0 : index
    %79 = vector.load %arg5[%c0_32, %c0_33] : memref<16x1xf32, #tpu.memory_space<vmem>>, vector<16x1xf32>
    tpu.vector_store %arg5[%c0_32, %c0_33], %67 {strides = array<i32>} : memref<16x1xf32, #tpu.memory_space<vmem>>, vector<16x1xf32>,
    %c0_i32_34 = arith.constant 0 : i32
    %80 = arith.cmpi eq, %arg1, %c0_i32_34 : i32
    %81 = arith.extui %80 : i1 to i32
    %c0_i32_35 = arith.constant 0 : i32
    %82 = arith.cmpi ne, %81, %c0_i32_35 : i32
    scf.if %82 {
      %c0_36 = arith.constant 0 : index
      %c0_37 = arith.constant 0 : index
      %83 = vector.load %arg5[%c0_36, %c0_37] : memref<16x1xf32, #tpu.memory_space<vmem>>, vector<16x1xf32>
      %c0_38 = arith.constant 0 : index
      %c0_39 = arith.constant 0 : index
      %84 = vector.load %arg6[%c0_38, %c0_39] : memref<16x1xf32, #tpu.memory_space<vmem>>, vector<16x1xf32>
      %85 = math.log %84 : vector<16x1xf32>
      %86 = arith.addf %83, %85 : vector<16x1xf32>
      %c0_40 = arith.constant 0 : index
      %c0_41 = arith.constant 0 : index
      %87 = vector.load %arg7[%c0_40, %c0_41] : memref<16x1xf32, #tpu.memory_space<vmem>>, vector<16x1xf32>
      %88 = arith.subf %86, %87 : vector<16x1xf32>
      %c16_i32_42 = arith.constant 16 : i32
      %89 = vector.broadcast %c16_i32_42 : i32 to vector<16x1xi32>
      %90 = arith.cmpi slt, %22, %89 : vector<16x1xi32>
      %cst_43 = arith.constant 0.000000e+00 : f32
      %91 = vector.broadcast %cst_43 : f32 to vector<16x1xf32>
      %92 = arith.select %90, %88, %91 : vector<16x1xi1>, vector<16x1xf32>
      %c0_44 = arith.constant 0 : index
      %c0_45 = arith.constant 0 : index
      %93 = vector.load %arg4[%c0_44, %c0_45] : memref<16x1xf32, #tpu.memory_space<vmem>>, vector<16x1xf32>
      tpu.vector_store %arg4[%c0_44, %c0_45], %92 {strides = array<i32>} : memref<16x1xf32, #tpu.memory_space<vmem>>, vector<16x1xf32>,
    } else {
    }
    return
  }
  func.func @transform_0(%arg0: i32, %arg1: i32) -> (i32, i32) {
    %c0_i32 = arith.constant 0 : i32
    %c0_i32_0 = arith.constant 0 : i32
    return %arg0, %c0_i32 : i32, i32
  }
  func.func @transform_1(%arg0: i32, %arg1: i32) -> (i32, i32) {
    %c0_i32 = arith.constant 0 : i32
    %c0_i32_0 = arith.constant 0 : i32
    return %arg1, %c0_i32 : i32, i32
  }
  func.func @transform_2(%arg0: i32, %arg1: i32) -> (i32, i32) {
    %c0_i32 = arith.constant 0 : i32
    %c0_i32_0 = arith.constant 0 : i32
    return %arg0, %c0_i32 : i32, i32
  }
}

</mosaic_0001>

<llo_original>
// kernel: tpu_custom_call.1
$region0: #{tpu_custom_call.1}
  #allocation0 [shape = 'u32[]', space=smem, size = 0x4, offset = 0x4, fixed_abs, tag = 'smem constant byte address 0x4 - core index']
  #allocation1 [shape = 'u32[144,128]{1,0:T(1,128)}', space=vmem, size = 0x12000, scoped, tag = 'internal scratch']
  #allocation2 [shape = 'f32[16,1]{1,0:T(8,128)}', space=vmem, size = 0x2000, scoped, tag = 'scratch operand']
  #allocation3 [shape = 'f32[16,1]{1,0:T(8,128)}', space=vmem, size = 0x2000, scoped, tag = 'scratch operand']
  #allocation4 [shape = 'f32[16,1]{1,0:T(8,128)}', space=vmem, size = 0x2000, scoped, tag = 'scratch operand']
  %s0 = inlined_call_operand.hbm [shape: f32[16,128], index: 0, kind: input, shape index: {}]
  %s1 = inlined_call_operand.hbm [shape: f32[16,128], index: 1, kind: input, shape index: {}]
  %s2 = inlined_call_operand.vmem [shape: f32[16,1], index: 2, kind: output, shape index: {}]
  %s3 = sld [smem:[#allocation0]]
  $region34: #{tpu_custom_call.1} parent=0
    _
  %s5 = ssub.s32 1, %s3
  %s6 = scalar_select 0, %s5, %s3
  $region1: #{tpu_custom_call.1} parent=0
    #allocation5 [shape = 'u8[8192]{0}', space=vmem, size = 0x2000, scoped, tag = 'input window, operand 0, single buffered']
    #allocation6 [shape = 's32[1]{0}', space=sflag, size = 0x4, scoped, tag = 'scoped memory for tpu_custom_call.1']
    #allocation7 [shape = 'u8[8192]{0}', space=vmem, size = 0x2000, scoped, tag = 'input window, operand 1, single buffered']
    #allocation8 [shape = 's32[1]{0}', space=sflag, size = 0x4, scoped, tag = 'scoped memory for tpu_custom_call.1']
    %7 = vsyncpa [#allocation6], 0
    %8 = vsyncpa [#allocation8], 0
    // Predicated region
    $region2: #{tpu_custom_call.1} parent=1 // pred_check
      _
    $region3: #{tpu_custom_call.1} parent=1 // pred_check_branch
      %10 = sbr.rel (0) target = $region5
    $region4: #{tpu_custom_call.1} parent=1 // pred_region
      %s12 = ssub.s32 256, 256
      %13 = vsyncadd [#allocation6], %s12
      %s14 = sshll.u32 [#allocation5], 4
      %s15 = int_to_ptr.vmem [resolvable:$true] %s14
      %20 = dma.hbm_to_vmem [thread:$0]  %s0, 256, %s15, [#allocation6], 128, 128, 8
    $region5: #{tpu_custom_call.1} parent=1 // pred_fallthru
      _
    // Predicated region
    $region6: #{tpu_custom_call.1} parent=1 // pred_check
      _
    $region7: #{tpu_custom_call.1} parent=1 // pred_check_branch
      %22 = sbr.rel (0) target = $region9
    $region8: #{tpu_custom_call.1} parent=1 // pred_region
      %s24 = ssub.s32 256, 256
      %25 = vsyncadd [#allocation8], %s24
      %s26 = sshll.u32 [#allocation7], 4
      %s27 = int_to_ptr.vmem [resolvable:$true] %s26
      %32 = dma.hbm_to_vmem [thread:$0]  %s1, 256, %s27, [#allocation8], 128, 128, 8
    $region9: #{tpu_custom_call.1} parent=1 // pred_fallthru
      _
    // Predicated region
    $region10: #{tpu_custom_call.1} parent=1 // pred_check
      _
    $region11: #{tpu_custom_call.1} parent=1 // pred_check_branch
      %34 = sbr.rel (0) target = $region13
    $region12: #{tpu_custom_call.1} parent=1 // pred_region
      %35 = dma.done [#allocation6], 256
    $region13: #{tpu_custom_call.1} parent=1 // pred_fallthru
      _
    // Predicated region
    $region14: #{tpu_custom_call.1} parent=1 // pred_check
      _
    $region15: #{tpu_custom_call.1} parent=1 // pred_check_branch
      %37 = sbr.rel (0) target = $region17
    $region16: #{tpu_custom_call.1} parent=1 // pred_region
      %38 = dma.done [#allocation8], 256
    $region17: #{tpu_custom_call.1} parent=1 // pred_fallthru
      _
    %p39 = scmp.eq.s32.totalorder 0, 0
    // Predicated region
    $region18: #{tpu_custom_call.1} parent=1 // pred_check
      %p40 = pneg %p39
    $region19: #{tpu_custom_call.1} parent=1 // pred_check_branch
      %42 = sbr.rel (%p40) target = $region21
    $region20: #{tpu_custom_call.1} parent=1 // pred_region
      %vm43 = vcmask 7168
      %44 = vst.msk [vmem:[#allocation2] sm:$0xff] %vm43, -1e+30
      %45 = vst.msk [vmem:[#allocation2 + $0x8] sm:$0xff] %vm43, -1e+30
      %46 = vst.msk [vmem:[#allocation3] sm:$0xff] %vm43, 0.0
      %47 = vst.msk [vmem:[#allocation3 + $0x8] sm:$0xff] %vm43, 0.0
      %48 = vst.msk [vmem:[#allocation4] sm:$0xff] %vm43, 0.0
      %49 = vst.msk [vmem:[#allocation4 + $0x8] sm:$0xff] %vm43, 0.0
    $region21: #{tpu_custom_call.1} parent=1 // pred_fallthru
      _
    %v50 = vld [vmem:[#allocation5] sm:$0xff]
    %v51 = vld [vmem:[#allocation5 + $0x8] sm:$0xff]
    %v52 = vmul.f32 %v50, 2.0
    %v53 = vmul.f32 %v51, 2.0
    %v54 = vld [vmem:[#allocation7] sm:$0xff]
    %v55 = vld [vmem:[#allocation7 + $0x8] sm:$0xff]
    %56 = vmatprep.subr.mxu0 0.0
    %57 = vmatpush1.xpose.msra.mxu0 %v54
    %58 = vmatprep.subr.mxu0 0.0
    %59 = vmatpush1.xpose.msra.mxu0 %v55
    %60 = vmatprep.subr.mxu0 0.0
    %61 = vmatpush1.xpose.msra.mxu0 0.0
    %62 = vmatprep.subr.mxu0 0.0
    %63 = vmatpush1.xpose.msra.mxu0 0.0
    %64 = vmatprep.subr.mxu0 0.0
    %65 = vmatpush1.xpose.msra.mxu0 0.0
    %66 = vmatprep.subr.mxu0 0.0
    %67 = vmatpush1.xpose.msra.mxu0 0.0
    %68 = vmatprep.subr.mxu0 0.0
    %69 = vmatpush1.xpose.msra.mxu0 0.0
    %70 = vmatprep.subr.mxu0 0.0
    %71 = vmatpush1.xpose.msra.mxu0 0.0
    %72 = vmatprep.subr.mxu0 0.0
    %73 = vmatpush1.xpose.msra.mxu0 0.0
    %74 = vmatprep.subr.mxu0 0.0
    %75 = vmatpush1.xpose.msra.mxu0 0.0
    %76 = vmatprep.subr.mxu0 0.0
    %77 = vmatpush1.xpose.msra.mxu0 0.0
    %78 = vmatprep.subr.mxu0 0.0
    %79 = vmatpush1.xpose.msra.mxu0 0.0
    %80 = vmatprep.subr.mxu0 0.0
    %81 = vmatpush1.xpose.msra.mxu0 0.0
    %82 = vmatprep.subr.mxu0 0.0
    %83 = vmatpush1.xpose.msra.mxu0 0.0
    %84 = vmatprep.subr.mxu0 0.0
    %85 = vmatpush1.xpose.msra.mxu0 0.0
    %86 = vmatprep.subr.mxu0 0.0
    %87 = vmatpush1.xpose.msra.mxu0 0.0
    %88 = vmatprep.subr.mxu0 0.0
    %89 = vmatpush1.xpose.msra.mxu0 0.0
    %90 = vmatprep.subr.mxu0 0.0
    %91 = vmatpush1.xpose.msra.mxu0 0.0
    %92 = vmatprep.subr.mxu0 0.0
    %93 = vmatpush1.xpose.msra.mxu0 0.0
    %94 = vmatprep.subr.mxu0 0.0
    %95 = vmatpush1.xpose.msra.mxu0 0.0
    %96 = vmatprep.subr.mxu0 0.0
    %97 = vmatpush1.xpose.msra.mxu0 0.0
    %98 = vmatprep.subr.mxu0 0.0
    %99 = vmatpush1.xpose.msra.mxu0 0.0
    %100 = vmatprep.subr.mxu0 0.0
    %101 = vmatpush1.xpose.msra.mxu0 0.0
    %102 = vmatprep.subr.mxu0 0.0
    %103 = vmatpush1.xpose.msra.mxu0 0.0
    %104 = vmatprep.subr.mxu0 0.0
    %105 = vmatpush1.xpose.msra.mxu0 0.0
    %106 = vmatprep.subr.mxu0 0.0
    %107 = vmatpush1.xpose.msra.mxu0 0.0
    %108 = vmatprep.subr.mxu0 0.0
    %109 = vmatpush1.xpose.msra.mxu0 0.0
    %110 = vmatprep.subr.mxu0 0.0
    %111 = vmatpush1.xpose.msra.mxu0 0.0
    %112 = vmatprep.subr.mxu0 0.0
    %113 = vmatpush1.xpose.msra.mxu0 0.0
    %114 = vmatprep.subr.mxu0 0.0
    %115 = vmatpush1.xpose.msra.mxu0 0.0
    %116 = vmatprep.subr.mxu0 0.0
    %117 = vmatpush1.xpose.msra.mxu0 0.0
    %118 = vmatprep.subr.mxu0 0.0
    %119 = vmatpush1.xpose.msra.mxu0 0.0
    %120 = vmatprep.mubr.f32.mxu0 0.0
    %121 = vmatmul.mubr.f32.gmra.mrb[0].mxu0 %v52
    %v122 = vpop.f32.mrb[0].mxu0
    %v123 = vadd.f32 0.0, %v122
    %v124 = vpop.f32.mrb[0].mxu0
    %125 = vmatprep.mubr.f32.mxu0 0.0
    %126 = vmatmul.mubr.f32.gmra.mrb[0].mxu0 %v53
    %v127 = vpop.f32.mrb[0].mxu0
    %v128 = vadd.f32 0.0, %v127
    %v129 = vpop.f32.mrb[0].mxu0
    %130 = vdwg.mxu0
    %vm131 = vcmp.ne.f32.partialorder %v123, %v123
    %vm132 = vcmp.ne.f32.partialorder %v128, %v128
    %v133 = vsel %vm131, 0.0, %v123
    %v134 = vsel %vm132, 0.0, %v128
    %vm135 = vcmp.eq.f32.partialorder %v133, inf
    %vm136 = vcmp.eq.f32.partialorder %v134, inf
    %v137 = vsel %vm135, 100000.0, %v133
    %v138 = vsel %vm136, 100000.0, %v134
    %vm139 = vcmp.eq.f32.partialorder %v137, -inf
    %vm140 = vcmp.eq.f32.partialorder %v138, -inf
    %v141 = vsel %vm139, -100000.0, %v137
    %v142 = vsel %vm140, -100000.0, %v138
    %s143 = smul.u32 0, 16
    %v144 = vlaneseq
    %v145 = vshrl.u32 %v144, 7
    %v146 = vadd.s32 %v145, 8
    %v147 = vstv %s143
    %v148 = vadd.s32 %v147, %v145
    %v149 = vadd.s32 %v147, %v146
    %s150 = smul.u32 0, 16
    %v151 = vlaneseq
    %v152 = vand.u32 %v151, 127
    %v153 = vstv %s150
    %v154 = vadd.s32 %v153, %v152
    %vm155 = vcmp.eq.s32.totalorder %v148, %v154
    %vm156 = vcmp.eq.s32.totalorder %v149, %v154
    %vm157 = vcmp.ge.s32.totalorder %v154, 16
    %v158 = vsel %vm157, 1, 0
    %vm159 = vcmp.eq.s32.totalorder %v158, 1
    %vm160 = vmor %vm155, %vm159
    %vm161 = vmor %vm156, %vm159
    %v162 = vsel %vm160, -1e+30, %v141
    %v163 = vsel %vm161, -1e+30, %v142
    %v164 = vadd.s32 %v148, 8
    %v165 = vadd.s32 %v149, 8
    %vm166 = vcmp.lt.s32.totalorder %v164, 0
    %v167 = vsub.s32 0, %v164
    %v168 = vsel %vm166, %v167, %v164
    %v169 = vshrl.u32 %v168, 4
    %v170 = vand.u32 %v168, 15
    %v171 = vsub.s32 0, %v170
    %v172 = vsel %vm166, %v171, %v170
    %vm173 = vcmp.lt.s32.totalorder %v165, 0
    %v174 = vsub.s32 0, %v165
    %v175 = vsel %vm173, %v174, %v165
    %v176 = vshrl.u32 %v175, 4
    %v177 = vand.u32 %v175, 15
    %v178 = vsub.s32 0, %v177
    %v179 = vsel %vm173, %v178, %v177
    %vm180 = vcmp.ne.s32.totalorder %v172, 0
    %vm181 = vcmp.ne.s32.totalorder %v179, 0
    %vm182 = vcmp.lt.s32.totalorder %v172, 0
    %vm183 = vcmp.lt.s32.totalorder %v179, 0
    %vm184 = vmand %vm182, %vm180
    %vm185 = vmand %vm183, %vm181
    %v186 = vadd.s32 %v172, 16
    %v187 = vadd.s32 %v179, 16
    %v188 = vsel %vm184, %v186, %v172
    %v189 = vsel %vm185, %v187, %v179
    %v190 = vld [vmem:[#allocation4] sm:$0xff]
    %v191 = vld [vmem:[#allocation4 + $0x8] sm:$0xff]
    %vm192 = vcmp.eq.s32.totalorder %v154, %v188
    %vm193 = vcmp.eq.s32.totalorder %v154, %v189
    %v194 = vsel %vm192, %v162, 0.0
    %v195 = vsel %vm193, %v163, 0.0
    %vm196 = vcmask 130048
    %v197 = vsel %vm196, %v194, 0.0
    %198 = vadd.xlane.f32.xlu0 %v197
    %v199 = vpop.xlane.xlu0 %198
    %v200 = vsel %vm196, %v195, 0.0
    %201 = vadd.xlane.f32.xlu0 %v200
    %v202 = vpop.xlane.xlu0 %201
    %v203 = vadd.f32 %v190, %v199
    %v204 = vadd.f32 %v191, %v202
    %vm205 = vcmask 7168
    %206 = vst.msk [vmem:[#allocation4] sm:$0xff] %vm205, %v203
    %207 = vst.msk [vmem:[#allocation4 + $0x8] sm:$0xff] %vm205, %v204
    %v208 = vld [vmem:[#allocation2] sm:$0xff]
    %v209 = vld [vmem:[#allocation2 + $0x8] sm:$0xff]
    %v210 = vsel %vm196, %v162, -inf
    %211 = vmax.xlane.f32.xlu0 %v210
    %v212 = vpop.xlane.xlu0 %211
    %v213 = vsel %vm196, %v163, -inf
    %214 = vmax.xlane.f32.xlu0 %v213
    %v215 = vpop.xlane.xlu0 %214
    %v216 = vmax.f32 %v208, %v212
    %v217 = vmax.f32 %v209, %v215
    %v218 = vsub.f32 %v208, %v216
    %v219 = vsub.f32 %v209, %v217
    %v220 = vmul.f32 %v218, 1.442695
    %v221 = vpow.pop %v220
    %v222 = vmul.f32 %v219, 1.442695
    %v223 = vpow.pop %v222
    %v224 = vld [vmem:[#allocation3] sm:$0xff]
    %v225 = vld [vmem:[#allocation3 + $0x8] sm:$0xff]
    %v226 = vmul.f32 %v221, %v224
    %v227 = vmul.f32 %v223, %v225
    %229 = vset.pattern.permute.xlu0 0
    %230 = vperm.xlu0 %229, %v216
    %v231 = vpop.permute.xlu0 %230
    %234 = vset.pattern.permute.xlu0 0
    %235 = vperm.xlu0 %234, %v217
    %v236 = vpop.permute.xlu0 %235
    %v238 = vsub.f32 %v162, %v231
    %v239 = vsub.f32 %v163, %v236
    %v240 = vmul.f32 %v238, 1.442695
    %v241 = vpow.pop %v240
    %v242 = vmul.f32 %v239, 1.442695
    %v243 = vpow.pop %v242
    %v244 = vsel %vm196, %v241, 0.0
    %245 = vadd.xlane.f32.xlu0 %v244
    %v246 = vpop.xlane.xlu0 %245
    %v247 = vsel %vm196, %v243, 0.0
    %248 = vadd.xlane.f32.xlu0 %v247
    %v249 = vpop.xlane.xlu0 %248
    %v250 = vadd.f32 %v226, %v246
    %v251 = vadd.f32 %v227, %v249
    %252 = vst.msk [vmem:[#allocation3] sm:$0xff] %vm205, %v250
    %253 = vst.msk [vmem:[#allocation3 + $0x8] sm:$0xff] %vm205, %v251
    %254 = vst.msk [vmem:[#allocation2] sm:$0xff] %vm205, %v216
    %255 = vst.msk [vmem:[#allocation2 + $0x8] sm:$0xff] %vm205, %v217
    // Predicated region
    $region22: #{tpu_custom_call.1} parent=1 // pred_check
      %p256 = pneg %p39
    $region23: #{tpu_custom_call.1} parent=1 // pred_check_branch
      %258 = sbr.rel (%p256) target = $region25
    $region24: #{tpu_custom_call.1} parent=1 // pred_region
      %v259 = vld [vmem:[#allocation2] sm:$0xff]
      %v260 = vld [vmem:[#allocation2 + $0x8] sm:$0xff]
      %v261 = vld [vmem:[#allocation3] sm:$0xff]
      %v262 = vld [vmem:[#allocation3 + $0x8] sm:$0xff]
      %v263 = vlog2.pop %v261
      %v264 = vmul.f32 %v263, 0.6931472
      %v265 = vlog2.pop %v262
      %v266 = vmul.f32 %v265, 0.6931472
      %v267 = vadd.f32 %v259, %v264
      %v268 = vadd.f32 %v260, %v266
      %v269 = vld [vmem:[#allocation4] sm:$0xff]
      %v270 = vld [vmem:[#allocation4 + $0x8] sm:$0xff]
      %v271 = vsub.f32 %v267, %v269
      %v272 = vsub.f32 %v268, %v270
      %vm273 = vcmp.lt.s32.totalorder %v148, 16
      %vm274 = vcmp.lt.s32.totalorder %v149, 16
      %v275 = vsel %vm273, %v271, 0.0
      %v276 = vsel %vm274, %v272, 0.0
      %277 = vst.msk [vmem:[%s2] sm:$0xff] %vm205, %v275
      %278 = vst.msk [vmem:[%s2 + $0x8] sm:$0xff] %vm205, %v276
    $region25: #{tpu_custom_call.1} parent=1 // pred_fallthru
      _
    // Predicated region
    $region26: #{tpu_custom_call.1} parent=1 // pred_check
      _
    $region27: #{tpu_custom_call.1} parent=1 // pred_check_branch
      %280 = sbr.rel (0) target = $region29
    $region28: #{tpu_custom_call.1} parent=1 // pred_region
      _
    $region29: #{tpu_custom_call.1} parent=1 // pred_fallthru
      _
    // Predicated region
    $region30: #{tpu_custom_call.1} parent=1 // pred_check
      _
    $region31: #{tpu_custom_call.1} parent=1 // pred_check_branch
      %282 = sbr.rel (0) target = $region33
    $region32: #{tpu_custom_call.1} parent=1 // pred_region
      _
    $region33: #{tpu_custom_call.1} parent=1 // pred_fallthru
      _
    %283 = vsyncpa [#allocation6], 1
    %284 = vsyncpa [#allocation8], 1

</llo_original>
